<compile_context>
chip_gen: v6e
topology: v6e:2x2x1
jax: 0.10.0
libtpu: 0.0.40
codegen_flags: <defaults>
</compile_context>

<pallas_src>
import functools

import jax
import jax.numpy as jnp
from jax.experimental import pallas as pl
from jax.experimental.pallas import tpu as pltpu


def _round_up(x, m):
    return ((x + m - 1) // m) * m


def _conv1x1_kernel(w_ref, x_ref, o_ref):
    # o[Cout, tile_p] = w[Cout, Cin] @ x[Cin, tile_p]
    # Pixels on the lane axis -> lane-dense stores; f32 accumulation on MXU.
    o_ref[0, :, :] = jnp.dot(
        w_ref[...], x_ref[0, :, :], preferred_element_type=jnp.float32
    ).astype(o_ref.dtype)


def conv1x1_pallas(x_ncp, weight, *, max_tile_p=2048,
                   compute_dtype=jnp.bfloat16, out_dtype=None):
    """1x1 conv as a channel-mixing matmul, staying in NCHW layout.

    x_ncp:  (N, Cin, P)   with P = H*W (pixels on the lane axis)
    weight: (Cout, Cin)
    returns (N, Cout, P)  in out_dtype (default: x dtype)
    """
    N, Cin, P = x_ncp.shape
    Cout, Cin_w = weight.shape
    assert Cin == Cin_w
    out_dtype = x_ncp.dtype if out_dtype is None else out_dtype

    # Large, lane-aligned pixel tile; pad P so the grid divides evenly.
    tile_p = min(max_tile_p, _round_up(P, 128))
    p_pad = _round_up(P, tile_p)
    if p_pad != P:
        x_ncp = jnp.pad(x_ncp, ((0, 0), (0, 0), (0, p_pad - P)))

    xc = x_ncp.astype(compute_dtype)
    wc = weight.astype(compute_dtype)

    grid = (N, p_pad // tile_p)

    cost = pl.CostEstimate(
        flops=2 * N * p_pad * Cin * Cout,
        transcendentals=0,
        bytes_accessed=(xc.size * xc.dtype.itemsize
                        + wc.size * wc.dtype.itemsize
                        + N * Cout * p_pad * jnp.dtype(out_dtype).itemsize),
    )

    y = pl.pallas_call(
        _conv1x1_kernel,
        out_shape=jax.ShapeDtypeStruct((N, Cout, p_pad), out_dtype),
        grid_spec=pltpu.PrefetchScalarGridSpec(
            num_scalar_prefetch=0,
            grid=grid,
            in_specs=[
                pl.BlockSpec((Cout, Cin), lambda n, j: (0, 0)),
                pl.BlockSpec((1, Cin, tile_p), lambda n, j: (n, 0, j)),
            ],
            out_specs=pl.BlockSpec((1, Cout, tile_p), lambda n, j: (n, 0, j)),
        ),
        compiler_params=pltpu.CompilerParams(
            dimension_semantics=("parallel", "parallel"),
        ),
        cost_estimate=cost,
    )(wc, xc)

    if p_pad != P:
        y = y[:, :, :P]
    return y


def pixel_shuffle(y, upscale):
    """PixelShuffle(upscale): (N, C*r^2, H, W) -> (N, C, H*r, W*r), NCHW.

    Pure layout permutation; kept as plain JAX reshape/transpose glue.
    """
    N, CB2, H, W = y.shape
    r = upscale
    C = CB2 // (r * r)
    y = y.reshape(N, C, r, r, H, W)
    y = y.transpose(0, 1, 4, 2, 5, 3)  # (N, C, H, r, W, r)
    return y.reshape(N, C, H * r, W * r)


def init_recon_block(x, weight, *, B, l, compute_dtype=jnp.bfloat16):
    """Forward of InitReconBlock.

    x:      (N, nB, H, W)  NCHW
    weight: (l*B^2, nB)    1x1-conv weight (trailing (1,1) squeezed; 4D ok too)
    returns (N, l, H*B, W*B)
    """
    N, Cin, H, W = x.shape
    if weight.ndim == 4:
        weight = weight.reshape(weight.shape[0], weight.shape[1])
    Cout = weight.shape[0]

    x_ncp = x.reshape(N, Cin, H * W)                 # free reshape in NCHW
    y_ncp = conv1x1_pallas(x_ncp, weight,
                           compute_dtype=compute_dtype, out_dtype=x.dtype)
    y = y_ncp.reshape(N, Cout, H, W)                 # already NCHW
    return pixel_shuffle(y, B)


if __name__ == "__main__":
    # Small but structurally faithful configuration:
    #   B=8, l=1, r=0.5  ->  nB = int(0.5 * 1 * 8^2) = 32, out_channels = 64
    B, l, r = 8, 1, 0.5
    nB = int(r * l * B ** 2)          # 32
    Cout = l * B ** 2                 # 64

    N, H, W = 2, 16, 16

    key = jax.random.PRNGKey(0)
    kx, kw = jax.random.split(key)
    x = jax.random.normal(kx, (N, nB, H, W), dtype=jnp.float32)
    # Deterministic synthetic conv weight, PyTorch shape (Cout, Cin, 1, 1)
    # with the trailing 1x1 squeezed.
    weight = jax.random.normal(kw, (Cout, nB), dtype=jnp.float32) * 0.05

    fwd = jax.jit(functools.partial(init_recon_block, B=B, l=l))
    out = jax.block_until_ready(fwd(x, weight))
    assert out.shape == (N, l, H * B, W * B), out.shape

    # Reference 1: same bf16 casts + f32 accumulation (tight check).
    y_bf = jnp.einsum(
        "nchw,oc->nohw",
        x.astype(jnp.bfloat16), weight.astype(jnp.bfloat16),
        preferred_element_type=jnp.float32,
    ).astype(jnp.float32)
    ref_bf = pixel_shuffle(y_bf, B)
    assert jnp.allclose(out, ref_bf, atol=1e-3, rtol=1e-3)

    # Reference 2: full f32 reference (loose check, bounds bf16 rounding).
    y_f32 = jnp.einsum("nchw,oc->nohw", x, weight)
    ref_f32 = pixel_shuffle(y_f32, B)
    assert jnp.allclose(out, ref_f32, atol=2e-2, rtol=2e-2)

    print("KERNEL_OK")
</pallas_src>

<mosaic_0001>
module attributes {stable_mosaic.version = 11 : i64} {
  func.func @_conv1x1_kernel(%arg0: i32, %arg1: i32, %arg2: memref<64x32xbf16, #tpu.memory_space<vmem>>, %arg3: memref<1x32x256xbf16, #tpu.memory_space<vmem>>, %arg4: memref<1x64x256xf32, #tpu.memory_space<vmem>>) attributes {dimension_semantics = [#tpu.dimension_semantics<parallel>, #tpu.dimension_semantics<parallel>], iteration_bounds = array<i64: 2, 1>, scalar_prefetch = 0 : i64, scratch_operands = 0 : i64, tpu.core_type = #tpu.core_type<tc>, window_params = [{pipeline_mode = #tpu.pipeline_mode<synchronous>, transform_indices = @transform_0, window_bounds = array<i64: 64, 32>}, {transform_indices = @transform_1, window_bounds = array<i64: 1, 32, 256>}, {transform_indices = @transform_2, window_bounds = array<i64: 1, 64, 256>}]} {
    %c0 = arith.constant 0 : index
    %c0_0 = arith.constant 0 : index
    %0 = vector.load %arg2[%c0, %c0_0] : memref<64x32xbf16, #tpu.memory_space<vmem>>, vector<64x32xbf16>
    %c0_1 = arith.constant 0 : index
    %c0_2 = arith.constant 0 : index
    %c0_3 = arith.constant 0 : index
    %1 = vector.load %arg3[%c0_1, %c0_2, %c0_3] : memref<1x32x256xbf16, #tpu.memory_space<vmem>>, vector<1x32x256xbf16>
    %2 = vector.shape_cast %1 : vector<1x32x256xbf16> to vector<32x256xbf16>
    %cst = arith.constant dense<0.000000e+00> : vector<64x256xf32>
    %3 = tpu.matmul %0, %2, %cst {dimension_numbers = #tpu.dot_dimension_numbers<[1], [0], [0], [1], [0, 0, 1, 1], [], []>} : vector<64x32xbf16>, vector<32x256xbf16>, vector<64x256xf32> -> vector<64x256xf32>
    %c0_4 = arith.constant 0 : index
    %c0_5 = arith.constant 0 : index
    %c0_6 = arith.constant 0 : index
    %4 = vector.load %arg4[%c0_4, %c0_5, %c0_6] : memref<1x64x256xf32, #tpu.memory_space<vmem>>, vector<1x64x256xf32>
    %5 = vector.shape_cast %4 : vector<1x64x256xf32> to vector<64x256xf32>
    %6 = vector.shape_cast %3 : vector<64x256xf32> to vector<1x64x256xf32>
    tpu.vector_store %arg4[%c0_4, %c0_5, %c0_6], %6 {strides = array<i32>} : memref<1x64x256xf32, #tpu.memory_space<vmem>>, vector<1x64x256xf32>,
    return
  }
  func.func @transform_0(%arg0: i32, %arg1: i32) -> (i32, i32) {
    %c0_i32 = arith.constant 0 : i32
    %c0_i32_0 = arith.constant 0 : i32
    %c0_i32_1 = arith.constant 0 : i32
    return %c0_i32, %c0_i32_0 : i32, i32
  }
  func.func @transform_1(%arg0: i32, %arg1: i32) -> (i32, i32, i32) {
    %c0_i32 = arith.constant 0 : i32
    %c0_i32_0 = arith.constant 0 : i32
    return %arg0, %c0_i32, %arg1 : i32, i32, i32
  }
  func.func @transform_2(%arg0: i32, %arg1: i32) -> (i32, i32, i32) {
    %c0_i32 = arith.constant 0 : i32
    %c0_i32_0 = arith.constant 0 : i32
    return %arg0, %c0_i32, %arg1 : i32, i32, i32
  }
}

</mosaic_0001>

<llo_original>
// kernel: init_recon_block.1
$region0: #{init_recon_block.1}
  #allocation0 [shape = 'u32[]', space=smem, size = 0x4, offset = 0x4, fixed_abs, tag = 'smem constant byte address 0x4 - core index']
  #allocation1 [shape = 'u32[144,128]{1,0:T(1,128)}', space=vmem, size = 0x12000, scoped, tag = 'internal scratch']
  %s0 = inlined_call_operand.vmem [shape: bf16[64,32], index: 0, kind: input, shape index: {}]
  %s1 = inlined_call_operand.vmem [shape: bf16[2,32,256], index: 1, kind: input, shape index: {}]
  %s2 = inlined_call_operand.vmem [shape: f32[2,64,256], index: 2, kind: output, shape index: {}]
  %s3 = sld [smem:[#allocation0]]
  $region41: #{init_recon_block.1} parent=0
    _
  %s5 = ssub.s32 1, %s3
  %s6 = scalar_select 0, %s5, %s3
  loop: start=0, step=1, limit=4
  $region2: #{init_recon_block.1} parent=0 // loop_pre_header
    _
  $region3: #{init_recon_block.1} parent=0 // loop_header
    %s8 = sphi 0, %s12
    %p9 = scmp.ge.s32.totalorder %s8, 4
    %s15 = sphi 0, %s27
    %s16 = sphi 0, %s23
    %s17 = sphi 0, %s15
    %s18 = sphi 0, %s16
    %s19 = sphi 0, %s17
    %s20 = sphi 0, %s18
    %s28 = sphi 0, %s28
    %s30 = sphi 0, %s28
    %s31 = sphi 0, %s30
    %s45 = sphi 0, %s31
    %s53 = sphi 0, %s55
    %s56 = sphi 0, %s53
    %s57 = sphi 0, %s56
    %s73 = sphi 0, %s57
    %s81 = sphi 0, %s83
    %s84 = sphi 0, %s81
    %s85 = sphi 0, %s84
    %s101 = sphi 0, %s85
  $region4: #{init_recon_block.1} parent=0 // loop_header_branch
    %11 = sbr.rel (%p9) target = $region8
  $region5: #{init_recon_block.1} parent=0 // loop_body
    %s13 = ssub.s32 %s8, 1
    %s14 = ssub.s32 %s8, 2
    %s21 = sadd.s32 1, %s16
    %p22 = scmp.ge.s32.totalorder %s21, 1
    %s23 = scalar_select %p22, 0, %s21
    %s24 = sadd.s32 1, %s15
    %s25 = scalar_select %p22, %s24, %s15
    %p26 = scmp.ge.s32.totalorder %s25, 2
    %s27 = scalar_select %p26, 0, %s25
    %s29 = sadd.s32 %s28, 1
    %p32 = scmp.eq.s32.totalorder %s8, 1
    %p33 = scmp.ne.s32.totalorder %s28, %s30
    %p34 = scmp.eq.s32.totalorder %s8, 0
    %p35 = por %p33, %p34
    %p36 = scmp.ne.s32.totalorder %s28, %s30
    %p37 = scmp.eq.s32.totalorder %s13, 1
    %p38 = por %p36, %p37
    %p39 = scmp.ne.s32.totalorder %s30, %s31
    %p40 = scmp.eq.s32.totalorder %s13, 0
    %p41 = por %p39, %p40
    %p42 = scmp.ne.s32.totalorder %s30, %s31
    %p43 = scmp.eq.s32.totalorder %s14, 1
    %p44 = por %p42, %p43
    %p46 = scmp.ne.s32.totalorder %s31, %s45
    %p47 = scmp.eq.s32.totalorder %s14, 0
    %p48 = por %p46, %p47
    %s49 = ssub.s32 %s15, %s27
    %s50 = ssub.s32 %s16, %s23
    %s51 = sor.u32 %s49, %s50
    %p52 = scmp.eq.s32.totalorder %s51, 0
    %s54 = sadd.s32 %s53, 1
    %s55 = scalar_select %p52, %s53, %s54
    %p58 = pneg %p52
    %p59 = scmp.eq.s32.totalorder %s8, 1
    %p60 = por %p58, %p59
    %p61 = scmp.ne.s32.totalorder %s53, %s56
    %p62 = scmp.eq.s32.totalorder %s8, 0
    %p63 = por %p61, %p62
    %p64 = scmp.ne.s32.totalorder %s53, %s56
    %p65 = scmp.eq.s32.totalorder %s13, 1
    %p66 = por %p64, %p65
    %p67 = scmp.ne.s32.totalorder %s56, %s57
    %p68 = scmp.eq.s32.totalorder %s13, 0
    %p69 = por %p67, %p68
    %p70 = scmp.ne.s32.totalorder %s56, %s57
    %p71 = scmp.eq.s32.totalorder %s14, 1
    %p72 = por %p70, %p71
    %p74 = scmp.ne.s32.totalorder %s57, %s73
    %p75 = scmp.eq.s32.totalorder %s14, 0
    %p76 = por %p74, %p75
    %s77 = ssub.s32 %s15, %s27
    %s78 = ssub.s32 %s16, %s23
    %s79 = sor.u32 %s77, %s78
    %p80 = scmp.eq.s32.totalorder %s79, 0
    %s82 = sadd.s32 %s81, 1
    %s83 = scalar_select %p80, %s81, %s82
    %p86 = pneg %p80
    %p87 = scmp.eq.s32.totalorder %s8, 1
    %p88 = por %p86, %p87
    %p89 = scmp.ne.s32.totalorder %s81, %s84
    %p90 = scmp.eq.s32.totalorder %s8, 0
    %p91 = por %p89, %p90
    %p92 = scmp.ne.s32.totalorder %s81, %s84
    %p93 = scmp.eq.s32.totalorder %s13, 1
    %p94 = por %p92, %p93
    %p95 = scmp.ne.s32.totalorder %s84, %s85
    %p96 = scmp.eq.s32.totalorder %s13, 0
    %p97 = por %p95, %p96
    %p98 = scmp.ne.s32.totalorder %s84, %s85
    %p99 = scmp.eq.s32.totalorder %s14, 1
    %p100 = por %p98, %p99
    %p102 = scmp.ne.s32.totalorder %s85, %s101
    %p103 = scmp.eq.s32.totalorder %s14, 0
    %p104 = por %p102, %p103
    %p105 = scmp.le.s32.totalorder 1, %s8
    %p106 = scmp.lt.s32.totalorder %s8, 3
    %p107 = pnand %p105, %p106
    %p108 = pneg %p107
    // Predicated region
    $region9: #{init_recon_block.1} parent=5 // pred_check
      _
    $region10: #{init_recon_block.1} parent=5 // pred_check_branch
      %110 = sbr.rel (%p107) target = $region12
    $region11: #{init_recon_block.1} parent=5 // pred_region
      %s111 = ssub.s32 %s8, 1
      // Predicated region
      $region13: #{init_recon_block.1} parent=11 // pred_check
        %p112 = pneg %p41
      $region14: #{init_recon_block.1} parent=11 // pred_check_branch
        %114 = sbr.rel (%p112) target = $region16
      $region15: #{init_recon_block.1} parent=11 // pred_region
        _
      $region16: #{init_recon_block.1} parent=11 // pred_fallthru
        _
    $region12: #{init_recon_block.1} parent=5 // pred_fallthru
      _
    %p115 = scmp.lt.s32.totalorder %s8, 2
    // Predicated region
    $region17: #{init_recon_block.1} parent=5 // pred_check
      %p116 = pneg %p115
    $region18: #{init_recon_block.1} parent=5 // pred_check_branch
      %118 = sbr.rel (%p116) target = $region20
    $region19: #{init_recon_block.1} parent=5 // pred_region
      // Predicated region
      $region21: #{init_recon_block.1} parent=19 // pred_check
        %p119 = pneg %p63
      $region22: #{init_recon_block.1} parent=19 // pred_check_branch
        %121 = sbr.rel (%p119) target = $region24
      $region23: #{init_recon_block.1} parent=19 // pred_region
        %s122 = smul.u32 2, %s16
        %p123 = scmp.lt.s32.totalorder %s15, 1
        %s124 = scalar_select %p123, %s15, 1
        %p125 = scmp.lt.s32.totalorder %s122, 1
        %s126 = scalar_select %p125, %s122, 1
        %s127 = smul.addr %s124, 8
        %s128 = sadd.s32 %s126, %s127
        %s129 = smul.addr %s128, 4
        %s130 = scalar_lea.vmem %s1, %s129
        %s131 = smul.u32 2, %s16
      $region24: #{init_recon_block.1} parent=19 // pred_fallthru
        _
    $region20: #{init_recon_block.1} parent=5 // pred_fallthru
      _
    %p132 = scmp.le.s32.totalorder 1, %s8
    %p133 = scmp.lt.s32.totalorder %s8, 3
    %p134 = pnand %p132, %p133
    %p135 = pneg %p134
    // Predicated region
    $region25: #{init_recon_block.1} parent=5 // pred_check
      _
    $region26: #{init_recon_block.1} parent=5 // pred_check_branch
      %137 = sbr.rel (%p134) target = $region28
    $region27: #{init_recon_block.1} parent=5 // pred_region
      %s138 = ssub.s32 %s8, 1
      %p139 = pneg %p41
      %p140 = pneg %p38
      %s141 = smul.u32 2, %s18
      %p142 = scmp.lt.s32.totalorder %s17, 1
      %s143 = scalar_select %p142, %s17, 1
      %p144 = scmp.lt.s32.totalorder %s141, 1
      %s145 = scalar_select %p144, %s141, 1
      %s146 = smul.addr %s143, 8
      %s147 = sadd.s32 %s145, %s146
      %s148 = smul.addr %s147, 4
      %s149 = scalar_lea.vmem %s1, %s148
      %p150 = pneg %p69
      %p151 = pneg %p66
      %p152 = pneg %p97
      %p153 = pneg %p94
      %s154 = smul.u32 2, %s18
      %p155 = scmp.lt.s32.totalorder %s17, 1
      %s156 = scalar_select %p155, %s17, 1
      %p157 = scmp.lt.s32.totalorder %s154, 1
      %s158 = scalar_select %p157, %s154, 1
      %s159 = smul.addr %s156, 16
      %s160 = sadd.s32 %s158, %s159
      %s161 = smul.addr %s160, 8
      %s162 = scalar_lea.vmem %s2, %s161
      %s163 = smul.u32 2, %s18
      %p164 = scmp.lt.s32.totalorder %s17, 1
      %s165 = scalar_select %p164, %s17, 1
      %p166 = scmp.lt.s32.totalorder %s163, 1
      %s167 = scalar_select %p166, %s163, 1
      %s168 = smul.addr %s165, 8
      %s169 = sadd.s32 %s167, %s168
      %s170 = smul.addr %s169, 4
      %s171 = scalar_lea.vmem %s1, %s170
      %s172 = smul.u32 2, %s18
      %s173 = smul.u32 2, %s18
      %p174 = scmp.lt.s32.totalorder %s17, 1
      %s175 = scalar_select %p174, %s17, 1
      %p176 = scmp.lt.s32.totalorder %s173, 1
      %s177 = scalar_select %p176, %s173, 1
      %s178 = smul.addr %s175, 16
      %s179 = sadd.s32 %s177, %s178
      %s180 = smul.addr %s179, 8
      %s181 = scalar_lea.vmem %s2, %s180
      %s182 = smul.u32 2, %s18
      %v184 = vld [vmem:[%s0] sm:$0xf]
      %v185 = vld [vmem:[%s0 + $0x4] sm:$0xf]
      %v186 = vld [vmem:[%s0 + $0x8] sm:$0xf]
      %v187 = vld [vmem:[%s0 + $0xc] sm:$0xf]
      %v188 = vld [vmem:[%s0 + $0x10] sm:$0xf]
      %v189 = vld [vmem:[%s0 + $0x14] sm:$0xf]
      %v190 = vld [vmem:[%s0 + $0x18] sm:$0xf]
      %v191 = vld [vmem:[%s0 + $0x1c] sm:$0xf]
      %v192 = vld [vmem:[%s171] sm:$0xff]
      %v193 = vld [vmem:[%s171 + $0x8] sm:$0xff]
      %v194 = vld [vmem:[%s171 + $0x10] sm:$0xff]
      %v195 = vld [vmem:[%s171 + $0x18] sm:$0xff]
      %v204 = vunpack.c.l.b16 %v184
      %v205 = vunpack.c.l.b16 %v185
      %v206 = vunpack.c.l.b16 %v186
      %v207 = vunpack.c.l.b16 %v187
      %v208 = vunpack.c.l.b16 %v188
      %v209 = vunpack.c.l.b16 %v189
      %v210 = vunpack.c.l.b16 %v190
      %v211 = vunpack.c.l.b16 %v191
      %v212 = vpack.c.b16 %v205, %v204
      %v213 = vpack.c.b16 %v207, %v206
      %v214 = vpack.c.b16 %v209, %v208
      %v215 = vpack.c.b16 %v211, %v210
      %v220 = vunpack.c.l.b16 %v192
      %v221 = vunpack.c.h.b16 %v192
      %v222 = vunpack.c.l.b16 %v193
      %v223 = vunpack.c.h.b16 %v193
      %v224 = vunpack.c.l.b16 %v194
      %v225 = vunpack.c.h.b16 %v194
      %v226 = vunpack.c.l.b16 %v195
      %v227 = vunpack.c.h.b16 %v195
      %v228 = vpack.c.b16 %v222, %v220
      %v229 = vpack.c.b16 %v223, %v221
      %v230 = vpack.c.b16 %v226, %v224
      %v231 = vpack.c.b16 %v227, %v225
      %vm236 = vcmask 261120
      %v238 = vsel %vm236, %v212, 0
      %v241 = vsel %vm236, %v213, 0
      %v244 = vsel %vm236, %v214, 0
      %v247 = vsel %vm236, %v215, 0
      %249 = vmatprep.subr.bf16.mxu0 0
      %250 = vmatpush1.bf16.msra.mxu0 0
      %251 = vmatprep.subr.bf16.mxu0 0
      %252 = vmatpush1.bf16.msra.mxu0 0
      %253 = vmatprep.subr.bf16.mxu0 0
      %254 = vmatpush1.bf16.msra.mxu0 0
      %255 = vmatprep.subr.bf16.mxu0 0
      %256 = vmatpush1.bf16.msra.mxu0 0
      %257 = vmatprep.subr.bf16.mxu0 0
      %258 = vmatpush1.bf16.msra.mxu0 0
      %259 = vmatprep.subr.bf16.mxu0 0
      %260 = vmatpush1.bf16.msra.mxu0 0
      %261 = vmatprep.subr.bf16.mxu0 %v231
      %262 = vmatpush1.bf16.msra.mxu0 %v230
      %263 = vmatprep.subr.bf16.mxu0 %v229
      %264 = vmatpush1.bf16.msra.mxu0 %v228
      %265 = vmatprep.subr.bf16.mxu0 0
      %266 = vmatpush2.bf16.msra.mxu0 0
      %267 = vmatprep.subr.bf16.mxu0 0
      %268 = vmatpush2.bf16.msra.mxu0 0
      %269 = vmatprep.subr.bf16.mxu0 0
      %270 = vmatpush2.bf16.msra.mxu0 0
      %271 = vmatprep.subr.bf16.mxu0 0
      %272 = vmatpush2.bf16.msra.mxu0 0
      %273 = vmatprep.subr.bf16.mxu0 0
      %274 = vmatpush2.bf16.msra.mxu0 0
      %275 = vmatprep.subr.bf16.mxu0 0
      %276 = vmatpush2.bf16.msra.mxu0 0
      %277 = vmatprep.subr.bf16.mxu0 0
      %278 = vmatpush2.bf16.msra.mxu0 0
      %279 = vmatprep.subr.bf16.mxu0 0
      %280 = vmatpush2.bf16.msra.mxu0 0
      %281 = vmatprep.mubr.bf16.mxu0 0
      %282 = vmatmul.mubr.bf16.gmra.mxu0 %v238
      %v283 = vpop.f32.mrf.mxu0
      %v284 = vadd.f32 0.0, %v283
      %v285 = vpop.f32.mrf.mxu0
      %v286 = vadd.f32 0.0, %v285
      %v287 = vpop.f32.mrf.mxu0
      %v288 = vadd.f32 0.0, %v287
      %v289 = vpop.f32.mrf.mxu0
      %v290 = vadd.f32 0.0, %v289
      %291 = vmatprep.mubr.bf16.mxu0 0
      %292 = vmatmul.mubr.bf16.gmra.mxu0 %v241
      %v293 = vpop.f32.mrf.mxu0
      %v294 = vadd.f32 0.0, %v293
      %v295 = vpop.f32.mrf.mxu0
      %v296 = vadd.f32 0.0, %v295
      %v297 = vpop.f32.mrf.mxu0
      %v298 = vadd.f32 0.0, %v297
      %v299 = vpop.f32.mrf.mxu0
      %v300 = vadd.f32 0.0, %v299
      %301 = vmatprep.mubr.bf16.mxu0 0
      %302 = vmatmul.mubr.bf16.gmra.mxu0 %v244
      %v303 = vpop.f32.mrf.mxu0
      %v304 = vadd.f32 0.0, %v303
      %v305 = vpop.f32.mrf.mxu0
      %v306 = vadd.f32 0.0, %v305
      %v307 = vpop.f32.mrf.mxu0
      %v308 = vadd.f32 0.0, %v307
      %v309 = vpop.f32.mrf.mxu0
      %v310 = vadd.f32 0.0, %v309
      %311 = vmatprep.mubr.bf16.mxu0 0
      %312 = vmatmul.mubr.bf16.gmra.mxu0 %v247
      %v313 = vpop.f32.mrf.mxu0
      %v314 = vadd.f32 0.0, %v313
      %v315 = vpop.f32.mrf.mxu0
      %v316 = vadd.f32 0.0, %v315
      %v317 = vpop.f32.mrf.mxu0
      %v318 = vadd.f32 0.0, %v317
      %v319 = vpop.f32.mrf.mxu0
      %v320 = vadd.f32 0.0, %v319
      %321 = vdwg.mxu0
      %322 = vst [vmem:[%s181] sm:$0xff] %v284
      %323 = vst [vmem:[%s181 + $0x8] sm:$0xff] %v286
      %324 = vst [vmem:[%s181 + $0x10] sm:$0xff] %v288
      %325 = vst [vmem:[%s181 + $0x18] sm:$0xff] %v290
      %326 = vst [vmem:[%s181 + $0x20] sm:$0xff] %v294
      %327 = vst [vmem:[%s181 + $0x28] sm:$0xff] %v296
      %328 = vst [vmem:[%s181 + $0x30] sm:$0xff] %v298
      %329 = vst [vmem:[%s181 + $0x38] sm:$0xff] %v300
      %330 = vst [vmem:[%s181 + $0x40] sm:$0xff] %v304
      %331 = vst [vmem:[%s181 + $0x48] sm:$0xff] %v306
      %332 = vst [vmem:[%s181 + $0x50] sm:$0xff] %v308
      %333 = vst [vmem:[%s181 + $0x58] sm:$0xff] %v310
      %334 = vst [vmem:[%s181 + $0x60] sm:$0xff] %v314
      %335 = vst [vmem:[%s181 + $0x68] sm:$0xff] %v316
      %336 = vst [vmem:[%s181 + $0x70] sm:$0xff] %v318
      %337 = vst [vmem:[%s181 + $0x78] sm:$0xff] %v320
      %s338 = smul.u32 2, %s18
      %p339 = scmp.lt.s32.totalorder %s17, 1
      %s340 = scalar_select %p339, %s17, 1
      %p341 = scmp.lt.s32.totalorder %s338, 1
      %s342 = scalar_select %p341, %s338, 1
      %s343 = smul.addr %s340, 16
      %s344 = sadd.s32 %s342, %s343
      %s345 = smul.addr %s344, 8
      %s346 = scalar_lea.vmem %s2, %s345
      // Predicated region
      $region29: #{init_recon_block.1} parent=27 // pred_check
        %p347 = pneg %p94
      $region30: #{init_recon_block.1} parent=27 // pred_check_branch
        %349 = sbr.rel (%p347) target = $region32
      $region31: #{init_recon_block.1} parent=27 // pred_region
        %s350 = smul.u32 2, %s18
      $region32: #{init_recon_block.1} parent=27 // pred_fallthru
        _
    $region28: #{init_recon_block.1} parent=5 // pred_fallthru
      _
    %p351 = scmp.le.s32.totalorder 2, %s8
    // Predicated region
    $region33: #{init_recon_block.1} parent=5 // pred_check
      %p352 = pneg %p351
    $region34: #{init_recon_block.1} parent=5 // pred_check_branch
      %354 = sbr.rel (%p352) target = $region36
    $region35: #{init_recon_block.1} parent=5 // pred_region
      %s355 = ssub.s32 %s8, 2
      // Predicated region
      $region37: #{init_recon_block.1} parent=35 // pred_check
        %p356 = pneg %p100
      $region38: #{init_recon_block.1} parent=35 // pred_check_branch
        %358 = sbr.rel (%p356) target = $region40
      $region39: #{init_recon_block.1} parent=35 // pred_region
        %s359 = smul.u32 2, %s20
        %p360 = scmp.lt.s32.totalorder %s19, 1
        %s361 = scalar_select %p360, %s19, 1
        %p362 = scmp.lt.s32.totalorder %s359, 1
        %s363 = scalar_select %p362, %s359, 1
        %s364 = smul.addr %s361, 16
        %s365 = sadd.s32 %s363, %s364
        %s366 = smul.addr %s365, 8
        %s367 = scalar_lea.vmem %s2, %s366
      $region40: #{init_recon_block.1} parent=35 // pred_fallthru
        _
    $region36: #{init_recon_block.1} parent=5 // pred_fallthru
      _
  $region6: #{init_recon_block.1} parent=0 // loop_footer
    %s12 = sadd.s32 1, %s8
  $region7: #{init_recon_block.1} parent=0 // loop_footer_branch
    %7 = sbr.rel target = $region3
  $region8: #{init_recon_block.1} parent=0 // loop_exit
    _

</llo_original>
